<compile_context>
chip_gen: v7x
topology: tpu7x:2x2x1
jax: 0.10.0
libtpu: 0.0.40
codegen_flags: <defaults>
</compile_context>

<pallas_src>
import math

import jax
import jax.numpy as jnp
from jax.experimental import pallas as pl
from jax.experimental.pallas import tpu as pltpu


_TARGET_BLOCK_BYTES = 3 << 19        # ~1.5 MiB soft target per block (review: 1-2 MiB)
_MAX_ROW_BLOCK_BYTES = 4 << 20       # hard cap for one flattened row in a single block
_MIN_CHUNK_BLOCK_BYTES = 256 << 10   # don't chunk (for parallelism) below this block size
_MIN_GRID_STEPS = 4                  # keep the pipeline (and both v7x TCs) fed
_PARALLEL_THRESHOLD_BYTES = 2 << 20  # below this, extra grid steps only add overhead
_PROMPT_RESIDENT_MAX_BYTES = 4 << 20 # keep the prompt resident in VMEM if this small


# --------------------------------------------------------------------------
# Kernels
# --------------------------------------------------------------------------
def _full_row_kernel(prompt_ref, tokens_ref, out_ref):
    """One block = bb batch rows x full flattened output row.

    prompt_ref : (1,  P*E)   -- broadcast over the bb batch rows
    tokens_ref : (bb, T*E)
    out_ref    : (bb, (P+T)*E)
    """
    pe = prompt_ref.shape[1]
    bb = out_ref.shape[0]
    out_ref[:, :pe] = jnp.broadcast_to(prompt_ref[...], (bb, pe)).astype(out_ref.dtype)
    out_ref[:, pe:] = tokens_ref[...].astype(out_ref.dtype)


def _make_chunked_kernel(n_prompt_chunks, chunk, prompt_resident):
    """Chunked path: grid axis 1 runs over [prompt chunks][token chunks]."""

    def kernel(prompt_ref, tokens_ref, out_ref):
        c = pl.program_id(1)
        bb, width = out_ref.shape

        @pl.when(c < n_prompt_chunks)
        def _():
            if prompt_resident:
                # Whole prompt stays resident in VMEM; slice the active chunk.
                start = pl.multiple_of(c * chunk, 128)
                p = prompt_ref[:, pl.ds(start, chunk)]
            else:
                p = prompt_ref[...]
            out_ref[...] = jnp.broadcast_to(p, (bb, width)).astype(out_ref.dtype)

        @pl.when(c >= n_prompt_chunks)
        def _():
            out_ref[...] = tokens_ref[...].astype(out_ref.dtype)

    return kernel


# --------------------------------------------------------------------------
# Host-side helpers
# --------------------------------------------------------------------------
def _divisors_desc(n):
    ds = set()
    i = 1
    while i * i <= n:
        if n % i == 0:
            ds.add(i)
            ds.add(n // i)
        i += 1
    return sorted(ds, reverse=True)


def _sublane(dtype):
    # Second-minor block dims must be a multiple of this (or equal the full dim).
    return max(8, 32 // jnp.dtype(dtype).itemsize)   # f32->8, bf16->16, int8->32


def _vmem_capacity_bytes():
    try:
        return int(pltpu.get_tpu_info().vmem_capacity_bytes)
    except Exception:
        return 64 * 1024 * 1024  # conservative: v7x per-TensorCore VMEM


def _pick_batch_block(B, row_cap, sublane, min_steps):
    """Divisor bb of B with (bb % sublane == 0 or bb == B) and bb <= row_cap,
    preferring configs that keep at least `min_steps` grid steps."""
    valid = [d for d in _divisors_desc(B) if d % sublane == 0 or d == B]
    within = [d for d in valid if d <= max(row_cap, 1)]
    pool = within if within else [min(valid)]   # nothing fits -> smallest legal block
    # First get as close to min_steps grid steps as possible, then the largest block.
    return max(pool, key=lambda d: (min(B // d, min_steps), d))


def _pick_chunk(PE, TE, col_cap):
    """Largest lane-dense (128-multiple) common divisor of P*E and T*E <= col_cap."""
    for d in _divisors_desc(math.gcd(PE, TE)):
        if d % 128 == 0 and d <= max(col_cap, 128):
            return d
    return None


# --------------------------------------------------------------------------
# Wrapper (equivalent of PromptConditionProvider.forward)
# --------------------------------------------------------------------------
def prompt_condition_provider(prompt: jax.Array, tokens: jax.Array, *,
                              max_block_cols: int | None = None) -> jax.Array:
    P, E = prompt.shape
    B, T, E2 = tokens.shape
    assert E == E2, "embedding dims must match"

    # Match torch.cat / jnp.concatenate dtype-promotion semantics.
    out_dtype = jnp.promote_types(prompt.dtype, tokens.dtype)
    itemsize = jnp.dtype(out_dtype).itemsize

    # Degenerate shapes: no kernel needed.
    if B == 0 or E == 0 or (P + T) == 0:
        return jnp.zeros((B, P + T, E), out_dtype)
    if P == 0:
        return tokens.astype(out_dtype)
    if T == 0:
        return jnp.broadcast_to(prompt.astype(out_dtype)[None], (B, P, E))

    PE, TE = P * E, T * E
    lout = PE + TE
    total_out_bytes = B * lout * itemsize

    # Lane-dense flattened row views (contiguous row-major -> free reshape).
    prompt2d = prompt.reshape(1, PE)
    tokens2d = tokens.reshape(B, TE)

    sublane = max(_sublane(prompt.dtype), _sublane(tokens.dtype), _sublane(out_dtype))
    target_elems = max(_TARGET_BLOCK_BYTES // itemsize, 128)

    col_cap = target_elems
    if max_block_cols is not None:
        col_cap = min(col_cap, max_block_cols)

    # ---- full-row candidate ------------------------------------------------
    bb_full = _pick_batch_block(B, max(target_elems // lout, 1), sublane, _MIN_GRID_STEPS)
    steps_full = B // bb_full

    # ---- chunked candidate ---------------------------------------------------
    chunk = _pick_chunk(PE, TE, col_cap)
    bb_c, chunk_block_bytes = None, 0
    if chunk is not None:
        bb_c = _pick_batch_block(B, max(target_elems // chunk, 1), sublane, 1)
        chunk_block_bytes = bb_c * chunk * itemsize

    # ---- routing -------------------------------------------------------------
    need_chunked = (lout * itemsize > _MAX_ROW_BLOCK_BYTES
                    or (max_block_cols is not None and lout > max_block_cols))
    want_chunked = (steps_full < _MIN_GRID_STEPS                       # more steps -> real
                    and total_out_bytes >= _PARALLEL_THRESHOLD_BYTES   # pipelining / 2 TCs,
                    and chunk_block_bytes >= _MIN_CHUNK_BLOCK_BYTES)   # but not via tiny blocks
    use_chunked = chunk is not None and (need_chunked or want_chunked)

    if use_chunked:
        n_p, n_t = PE // chunk, TE // chunk
        assert n_p >= 1 and n_t >= 1
        bb = bb_c
        prompt_resident = PE * jnp.dtype(prompt.dtype).itemsize <= _PROMPT_RESIDENT_MAX_BYTES
        kernel = _make_chunked_kernel(n_p, chunk, prompt_resident)
        if prompt_resident:
            # Constant block index -> the prompt is DMA'd from HBM exactly once for
            # the entire grid and stays resident (no re-reads per batch block).
            prompt_spec = pl.BlockSpec((1, PE), lambda b, c: (0, 0))
            prompt_block_elems = PE
        else:
            prompt_spec = pl.BlockSpec((1, chunk), lambda b, c: (0, jnp.minimum(c, n_p - 1)))
            prompt_block_elems = chunk
        in_specs = [
            prompt_spec,
            # During prompt steps the clamp pins the token block index at 0; Pallas
            # fetches it once and reuses it at c == n_p, so this is a free prefetch,
            # not redundant traffic.
            pl.BlockSpec((bb, chunk), lambda b, c: (b, jnp.maximum(c - n_p, 0))),
        ]
        out_specs = pl.BlockSpec((bb, chunk), lambda b, c: (b, c))
        grid = (B // bb, n_p + n_t)
        dim_sem = ("parallel", "parallel")   # disjoint writes -> both axes shardable
        stream_block_bytes = (prompt_block_elems * jnp.dtype(prompt.dtype).itemsize
                              + bb * chunk * jnp.dtype(tokens.dtype).itemsize
                              + bb * chunk * itemsize)
    else:
        # Full-row path (also the fallback when a row exceeds the soft budget but no
        # lane-dense common chunk exists; vmem_limit below is sized from the real block).
        # TODO(synk): truly huge rows with no 128-multiple gcd chunk would need a
        # manual-DMA / BoundedSlice kernel; not needed for these shapes.
        bb = bb_full
        kernel = _full_row_kernel
        in_specs = [
            pl.BlockSpec((1, PE), lambda b: (0, 0)),      # fetched once, resident
            pl.BlockSpec((bb, TE), lambda b: (b, 0)),
        ]
        out_specs = pl.BlockSpec((bb, lout), lambda b: (b, 0))
        grid = (B // bb,)
        dim_sem = ("parallel",)
        stream_block_bytes = (PE * jnp.dtype(prompt.dtype).itemsize
                              + bb * TE * jnp.dtype(tokens.dtype).itemsize
                              + bb * lout * itemsize)

    # ---- VMEM budget: what the double-buffered blocks actually need -----------
    vmem_cap = _vmem_capacity_bytes()
    needed = 2 * stream_block_bytes + (1 << 20)
    ceiling = max(vmem_cap - (16 << 20), 16 << 20)   # leave headroom for Mosaic / fusion
    vmem_limit = int(min(max(needed + (4 << 20), 16 << 20), ceiling))
    if needed > vmem_limit:   # oversized fallback: trade headroom for compiling at all
        vmem_limit = int(min(needed + (2 << 20), vmem_cap - (2 << 20)))

    bytes_accessed = (prompt.size * jnp.dtype(prompt.dtype).itemsize
                      + tokens.size * jnp.dtype(tokens.dtype).itemsize
                      + total_out_bytes)

    out2d = pl.pallas_call(
        kernel,
        out_shape=jax.ShapeDtypeStruct((B, lout), out_dtype),
        grid=grid,
        in_specs=in_specs,
        out_specs=out_specs,
        compiler_params=pltpu.CompilerParams(
            dimension_semantics=dim_sem,
            vmem_limit_bytes=vmem_limit,
        ),
        cost_estimate=pl.CostEstimate(
            flops=0, transcendentals=0, bytes_accessed=int(bytes_accessed)),
    )(prompt2d, tokens2d)

    return out2d.reshape(B, P + T, E)


def reference(prompt: jax.Array, tokens: jax.Array) -> jax.Array:
    B = tokens.shape[0]
    prompt_expanded = jnp.broadcast_to(prompt[None], (B,) + prompt.shape)
    return jnp.concatenate([prompt_expanded, tokens], axis=1)


# --------------------------------------------------------------------------
# Demo / self-test
# --------------------------------------------------------------------------
if __name__ == "__main__":
    key = jax.random.PRNGKey(0)
    k1, k2, k3, k4, k5, k6 = jax.random.split(key, 6)

    # Test 1: module-sized shapes (prompt_length=4, embedding_dim=32, B=2, T=8).
    # Full-row path: one lane-dense (2, 384) output block, split at lane 128.
    P, E, B, T = 4, 32, 2, 8
    prompt = jax.random.normal(k1, (P, E), jnp.float32)
    tokens = jax.random.normal(k2, (B, T, E), jnp.float32)
    out = jax.block_until_ready(prompt_condition_provider(prompt, tokens))
    ref = reference(prompt, tokens)
    assert out.shape == (B, P + T, E)
    assert out.dtype == ref.dtype
    assert bool(jnp.array_equal(out, ref)), "full-row path mismatch vs reference"

    # Test 2: force the chunked path (resident prompt, clamped token prefetch)
    # plus dtype promotion (f32 prompt + bf16 tokens -> f32 out, like torch.cat).
    P2, E2, B2, T2 = 8, 128, 4, 64
    prompt2 = jax.random.normal(k3, (P2, E2), jnp.float32)
    tokens2 = jax.random.normal(k4, (B2, T2, E2), jnp.float32).astype(jnp.bfloat16)
    out2 = jax.block_until_ready(
        prompt_condition_provider(prompt2, tokens2, max_block_cols=1024))
    ref2 = reference(prompt2, tokens2)
    assert out2.shape == (B2, P2 + T2, E2)
    assert out2.dtype == ref2.dtype
    assert bool(jnp.array_equal(out2, ref2)), "chunked path mismatch vs reference"

    # Test 3: larger batch -> sublane-aligned bb (= 8 for f32) with a multi-step grid.
    P3, E3, B3, T3 = 4, 32, 16, 8
    prompt3 = jax.random.normal(k5, (P3, E3), jnp.float32)
    tokens3 = jax.random.normal(k6, (B3, T3, E3), jnp.float32)
    out3 = jax.block_until_ready(prompt_condition_provider(prompt3, tokens3))
    ref3 = reference(prompt3, tokens3)
    assert out3.shape == (B3, P3 + T3, E3)
    assert bool(jnp.array_equal(out3, ref3)), "multi-step batch path mismatch vs reference"

    print("KERNEL_OK")
</pallas_src>

<mosaic_0001>
module attributes {stable_mosaic.version = 11 : i64} {
  func.func @_full_row_kernel(%arg0: i32, %arg1: memref<1x128xf32, #tpu.memory_space<vmem>>, %arg2: memref<2x256xf32, #tpu.memory_space<vmem>>, %arg3: memref<2x384xf32, #tpu.memory_space<vmem>>) attributes {dimension_semantics = [#tpu.dimension_semantics<parallel>], iteration_bounds = array<i64: 1>, scalar_prefetch = 0 : i64, scratch_operands = 0 : i64, tpu.core_type = #tpu.core_type<tc>, window_params = [{pipeline_mode = #tpu.pipeline_mode<synchronous>, transform_indices = @transform_0, window_bounds = array<i64: 1, 128>}, {transform_indices = @transform_1, window_bounds = array<i64: 2, 256>}, {transform_indices = @transform_2, window_bounds = array<i64: 2, 384>}]} {
    %c0 = arith.constant 0 : index
    %c0_0 = arith.constant 0 : index
    %0 = vector.load %arg1[%c0, %c0_0] : memref<1x128xf32, #tpu.memory_space<vmem>>, vector<1x128xf32>
    %1 = vector.shape_cast %0 : vector<1x128xf32> to vector<1x128xf32>
    %2 = vector.broadcast %1 : vector<1x128xf32> to vector<2x128xf32>
    %c0_1 = arith.constant 0 : index
    %c0_2 = arith.constant 0 : index
    %3 = vector.load %arg3[%c0_1, %c0_2] : memref<2x384xf32, #tpu.memory_space<vmem>>, vector<2x128xf32>
    tpu.vector_store %arg3[%c0_1, %c0_2], %2 {strides = array<i32>} : memref<2x384xf32, #tpu.memory_space<vmem>>, vector<2x128xf32>,
    %c0_3 = arith.constant 0 : index
    %c0_4 = arith.constant 0 : index
    %4 = vector.load %arg2[%c0_3, %c0_4] : memref<2x256xf32, #tpu.memory_space<vmem>>, vector<2x256xf32>
    %c0_5 = arith.constant 0 : index
    %c128 = arith.constant 128 : index
    %5 = vector.load %arg3[%c0_5, %c128] : memref<2x384xf32, #tpu.memory_space<vmem>>, vector<2x256xf32>
    tpu.vector_store %arg3[%c0_5, %c128], %4 {strides = array<i32>} : memref<2x384xf32, #tpu.memory_space<vmem>>, vector<2x256xf32>,
    return
  }
  func.func @transform_0(%arg0: i32) -> (i32, i32) {
    %c0_i32 = arith.constant 0 : i32
    %c0_i32_0 = arith.constant 0 : i32
    %c0_i32_1 = arith.constant 0 : i32
    return %c0_i32, %c0_i32_0 : i32, i32
  }
  func.func @transform_1(%arg0: i32) -> (i32, i32) {
    %c0_i32 = arith.constant 0 : i32
    %c0_i32_0 = arith.constant 0 : i32
    return %arg0, %c0_i32 : i32, i32
  }
  func.func @transform_2(%arg0: i32) -> (i32, i32) {
    %c0_i32 = arith.constant 0 : i32
    %c0_i32_0 = arith.constant 0 : i32
    return %arg0, %c0_i32 : i32, i32
  }
}

</mosaic_0001>

<llo_original>
// kernel: tpu_custom_call.1
$region0: #{tpu_custom_call.1}
  #allocation0 [shape = 'u32[]', space=smem, size = 0x4, offset = 0x4, fixed_abs, tag = 'smem constant byte address 0x4 - core index']
  #allocation1 [shape = 'u32[144,128]{1,0:T(1,128)}', space=vmem, size = 0x12000, scoped, tag = 'internal scratch']
  %s0 = inlined_call_operand.hbm [shape: f32[1,128], index: 0, kind: input, shape index: {}]
  %s1 = inlined_call_operand.hbm [shape: f32[2,256], index: 1, kind: input, shape index: {}]
  %s2 = inlined_call_operand.hbm [shape: f32[2,384], index: 2, kind: output, shape index: {}]
  %s3 = sld [smem:[#allocation0]]
  $region26: #{tpu_custom_call.1} parent=0
    _
  %s5 = ssub.s32 1, %s3
  %s6 = scalar_select 0, %s5, %s3
  $region1: #{tpu_custom_call.1} parent=0
    #allocation2 [shape = 'u8[512]{0}', space=vmem, size = 0x400, scoped, tag = 'input window, operand 0, single buffered']
    #allocation3 [shape = 's32[1]{0}', space=sflag, size = 0x4, scoped, tag = 'scoped memory for tpu_custom_call.1']
    #allocation4 [shape = 's32[1]{0}', space=sflag, size = 0x4, scoped, tag = 'scoped memory for tpu_custom_call.1']
    #allocation5 [shape = 'u8[2048]{0}', space=vmem, size = 0x800, scoped, tag = 'input window, operand 1, single buffered']
    #allocation6 [shape = 's32[1]{0}', space=sflag, size = 0x4, scoped, tag = 'scoped memory for tpu_custom_call.1']
    #allocation7 [shape = 'u8[3072]{0}', space=vmem, size = 0xc00, scoped, tag = 'output window, operand 0, single buffered']
    %7 = vsyncpa [#allocation3], 0
    %8 = vsyncpa [#allocation6], 0
    %9 = vsyncpa [#allocation4], 0
    // Predicated region
    $region2: #{tpu_custom_call.1} parent=1 // pred_check
      _
    $region3: #{tpu_custom_call.1} parent=1 // pred_check_branch
      %11 = sbr.rel (0) target = $region5
    $region4: #{tpu_custom_call.1} parent=1 // pred_region
      %s13 = ssub.s32 16, 16
      %14 = vsyncadd [#allocation3], %s13
      %s16 = sshll.u32 [#allocation2], 4
      %s17 = int_to_ptr.vmem [resolvable:$true] %s16
      %19 = dma.hbm_to_vmem [thread:$0]  %s0, 16, %s17, [#allocation3]
    $region5: #{tpu_custom_call.1} parent=1 // pred_fallthru
      _
    // Predicated region
    $region6: #{tpu_custom_call.1} parent=1 // pred_check
      _
    $region7: #{tpu_custom_call.1} parent=1 // pred_check_branch
      %21 = sbr.rel (0) target = $region9
    $region8: #{tpu_custom_call.1} parent=1 // pred_region
      %s23 = ssub.s32 64, 64
      %24 = vsyncadd [#allocation6], %s23
      %s26 = sshll.u32 [#allocation5], 4
      %s27 = int_to_ptr.vmem [resolvable:$true] %s26
      %29 = dma.hbm_to_vmem [thread:$0]  %s1, 64, %s27, [#allocation6]
    $region9: #{tpu_custom_call.1} parent=1 // pred_fallthru
      _
    // Predicated region
    $region10: #{tpu_custom_call.1} parent=1 // pred_check
      _
    $region11: #{tpu_custom_call.1} parent=1 // pred_check_branch
      %31 = sbr.rel (0) target = $region13
    $region12: #{tpu_custom_call.1} parent=1 // pred_region
      %32 = dma.done [#allocation3], 16
    $region13: #{tpu_custom_call.1} parent=1 // pred_fallthru
      _
    // Predicated region
    $region14: #{tpu_custom_call.1} parent=1 // pred_check
      _
    $region15: #{tpu_custom_call.1} parent=1 // pred_check_branch
      %34 = sbr.rel (0) target = $region17
    $region16: #{tpu_custom_call.1} parent=1 // pred_region
      %35 = dma.done [#allocation6], 64
    $region17: #{tpu_custom_call.1} parent=1 // pred_fallthru
      _
    %v36 = vld [vmem:[#allocation2] sm:$0x1]
    %v38 = vlaneseq
    %v39 = vshrl.u32 %v38, 7
    %v40 = vsub.s32 0, %v39
    %v41 = vrot.slane %v36, %v40
    %43 = vst [vmem:[#allocation7] sm:$0x3] %v41
    %v44 = vld [vmem:[#allocation5] sm:$0xf]
    %45 = vst [vmem:[#allocation7 + $0x2] sm:$0xf] %v44
    // Predicated region
    $region18: #{tpu_custom_call.1} parent=1 // pred_check
      _
    $region19: #{tpu_custom_call.1} parent=1 // pred_check_branch
      %47 = sbr.rel (0) target = $region21
    $region20: #{tpu_custom_call.1} parent=1 // pred_region
      %s49 = ssub.s32 96, 96
      %50 = vsyncadd [#allocation4], %s49
      %s52 = sshll.u32 [#allocation7], 4
      %s53 = int_to_ptr.vmem [resolvable:$true] %s52
      %55 = dma.vmem_to_hbm [thread:$0]  %s53, 96, %s2, [#allocation4]
    $region21: #{tpu_custom_call.1} parent=1 // pred_fallthru
      _
    // Predicated region
    $region22: #{tpu_custom_call.1} parent=1 // pred_check
      _
    $region23: #{tpu_custom_call.1} parent=1 // pred_check_branch
      %57 = sbr.rel (0) target = $region25
    $region24: #{tpu_custom_call.1} parent=1 // pred_region
      %58 = dma.done [#allocation4], 96
    $region25: #{tpu_custom_call.1} parent=1 // pred_fallthru
      _
    %59 = vsyncpa [#allocation3], 1
    %60 = vsyncpa [#allocation6], 1
    %61 = vsyncpa [#allocation4], 1

</llo_original>
